<compile_context>
chip_gen: v5e
topology: v5e:2x2
jax: 0.10.0
libtpu: 0.0.40
codegen_flags: <defaults>
</compile_context>

<pallas_src>
import functools

import jax
import jax.numpy as jnp
from jax import lax
from jax.experimental import pallas as pl
from jax.experimental.pallas import tpu as pltpu


def _round_up(n, m):
    return ((n + m - 1) // m) * m


def _vmem_capacity_bytes():
    try:
        return int(pltpu.get_tpu_info().vmem_capacity_bytes)
    except Exception:
        return 64 << 20  # conservative fallback: v7x per-TensorCore VMEM


def _distlinear_kernel(x_ref, w_ref, o_ref, xn_ref, *, approx_recip):
    # x_ref : [tm, K]  f32           (K = padded indim, untiled)
    # w_ref : [tn, K]  compute_dtype (natural [outdim, indim] layout, trans_b matmul)
    # o_ref : [tm, tn] f32
    # xn_ref: [tm, K]  compute_dtype VMEM scratch: normalized + 10x-scaled x,
    #         cached across the inner column-tile axis.
    j = pl.program_id(1)

    @pl.when(j == 0)
    def _():
        x = x_ref[...]
        # Row L2 norm (dim=1 in the PyTorch module), f32 on the VPU/XLU.
        norm = jnp.sqrt(jnp.sum(x * x, axis=1, keepdims=True))      # [tm, 1]
        inv = pl.reciprocal(norm + 1e-5, approx=approx_recip)       # [tm, 1]
        # Fold scale_factor=10 into the per-row column; cast once for the MXU.
        xn_ref[...] = (x * (10.0 * inv)).astype(xn_ref.dtype)

    # trans_b matmul on the MXU: [tm, K] x [tn, K]^T -> [tm, tn], f32 accumulate.
    o_ref[...] = lax.dot_general(
        xn_ref[...],
        w_ref[...],
        dimension_numbers=(((1,), (1,)), ((), ())),
        preferred_element_type=jnp.float32,
    )


def dist_linear(x, weight, *, compute_dtype=jnp.bfloat16):
    """distLinear forward.

    x:      [B, indim]      float32
    weight: [outdim, indim] float32 (PyTorch nn.Linear layout)
    compute_dtype: dtype of the MXU operands (normalized x and W). bfloat16 is
      the production default (native MXU rate, half the weight traffic);
      float32 reproduces the reference to ~1e-6.
    """
    B, indim = x.shape
    outdim, indim_w = weight.shape
    assert indim_w == indim

    cdtype = jnp.dtype(compute_dtype)
    cbytes = cdtype.itemsize
    # Sub-32-bit VMEM refs need (16, 128) tiling on the second-to-last dim.
    min_sub = 16 if cbytes < 4 else 8

    # Lane-dense / MXU-friendly padded sizes. Zero padding is semantics
    # neutral: zero feature columns change neither the L2 norm nor the dot,
    # and padded batch rows / output columns are sliced off below.
    K = _round_up(indim, 128)   # contraction dim, kept untiled
    N = _round_up(outdim, 128)  # output lane dim

    if B >= 256:
        tm = 256
    elif B >= 128:
        tm = 128
    else:
        tm = _round_up(B, min_sub)
    if N % 512 == 0 and N >= 512:
        tn = 512
    elif N % 256 == 0:
        tn = 256
    else:
        tn = 128

    # Shrink tiles until the pipelined working set fits a conservative VMEM
    # budget for the detected generation (v7x only has 64 MiB per TensorCore).
    vmem_cap = _vmem_capacity_bytes()
    budget = max(16 << 20, vmem_cap // 2 - (8 << 20))

    def _footprint(tm_, tn_):
        w_bufs = 3 if (N // tn_) >= 3 else 2
        return (2 * tm_ * K * 4              # x tiles (f32, double-buffered)
                + w_bufs * tn_ * K * cbytes  # weight tiles
                + 2 * tm_ * tn_ * 4          # output tiles (f32)
                + tm_ * K * cbytes)          # xn scratch

    while _footprint(tm, tn) > budget and tn > 128:
        tn //= 2
    while _footprint(tm, tn) > budget and tm > min_sub:
        tm = max(min_sub, (tm // 2) // min_sub * min_sub)
    # TODO(synk): for indim large enough that even (min_sub, 128) untiled-K
    # tiles exceed the budget, add a K grid axis + f32 accumulator scratch.

    Bp = _round_up(B, tm)
    n_row_tiles = Bp // tm
    n_col_tiles = N // tn
    grid = (n_row_tiles, n_col_tiles)  # batch outer -> x tile resident across columns

    # Pad + cast operands. NOTE: in production the weight pad/cast is a pure
    # function of the parameters and should be hoisted to parameter init so it
    # is not re-done (a full HBM read+write of the largest operand) per call.
    xp = x if (Bp, K) == (B, indim) else jnp.pad(x, ((0, Bp - B), (0, K - indim)))
    wp = weight if (N, K) == (outdim, indim) else jnp.pad(
        weight, ((0, N - outdim), (0, K - indim)))
    wp = wp.astype(cdtype)

    footprint = _footprint(tm, tn)
    vmem_limit = int(min(vmem_cap - (8 << 20),
                         max(32 << 20, footprint + (8 << 20))))

    w_spec_kwargs = {}
    if n_col_tiles >= 3:
        # Deeper pipelining hides the multi-MiB weight DMA at tile transitions.
        w_spec_kwargs["pipeline_mode"] = pl.Buffered(3)

    cost = pl.CostEstimate(
        flops=2 * Bp * K * N + 3 * Bp * K,
        transcendentals=2 * Bp,                            # per-row sqrt + recip
        bytes_accessed=(4 * Bp * K                         # x read once
                        + n_row_tiles * N * K * cbytes     # W streamed per batch tile
                        + 4 * Bp * N),                     # output written once
    )

    out_padded = pl.pallas_call(
        functools.partial(_distlinear_kernel,
                          approx_recip=(cdtype != jnp.float32)),
        out_shape=jax.ShapeDtypeStruct((Bp, N), jnp.float32),
        grid=grid,
        in_specs=[
            # x tile: block index constant across the inner column axis ->
            # DMA'd from HBM exactly once per batch tile.
            pl.BlockSpec((tm, K), lambda i, j: (i, 0),
                         memory_space=pltpu.MemorySpace.VMEM),
            # weight tile: natural [outdim, indim] layout, streamed along the
            # inner axis (no wrapper-side transpose).
            pl.BlockSpec((tn, K), lambda i, j: (j, 0),
                         memory_space=pltpu.MemorySpace.VMEM,
                         **w_spec_kwargs),
        ],
        out_specs=pl.BlockSpec((tm, tn), lambda i, j: (i, j),
                               memory_space=pltpu.MemorySpace.VMEM),
        scratch_shapes=[pltpu.VMEM((tm, K), cdtype)],
        compiler_params=pltpu.CompilerParams(
            # Column axis must stay sequential: later column tiles reuse the
            # xn scratch written under j == 0. Batch axis splits across
            # TensorCores (v7x megacore) whenever Bp/tm >= 2.
            dimension_semantics=("parallel", "arbitrary"),
            vmem_limit_bytes=vmem_limit,
        ),
        cost_estimate=cost,
    )(xp, wp)

    return out_padded[:B, :outdim]


def dist_linear_ref(x, weight):
    norm = jnp.linalg.norm(x, axis=1, keepdims=True)
    xn = x / (norm + 1e-5)
    return 10.0 * (xn @ weight.T)


if __name__ == "__main__":
    B, indim, outdim = 8, 32, 16

    key = jax.random.PRNGKey(0)
    kx, kw = jax.random.split(key)

    x = jax.random.normal(kx, (B, indim), dtype=jnp.float32)
    # nn.Linear default init: U(-1/sqrt(indim), 1/sqrt(indim)), deterministic here.
    bound = 1.0 / (indim ** 0.5)
    weight = jax.random.uniform(kw, (outdim, indim), dtype=jnp.float32,
                                minval=-bound, maxval=bound)

    ref = dist_linear_ref(x, weight)

    # Strict-accuracy path (f32 MXU operands): matches the PyTorch reference.
    out_f32 = jax.block_until_ready(dist_linear(x, weight, compute_dtype=jnp.float32))
    assert out_f32.shape == (B, outdim)
    assert jnp.allclose(out_f32, ref, atol=1e-4, rtol=1e-4), "f32 path mismatch"

    # Production path (bf16 MXU operands, f32 accumulation): looser tolerance.
    out_bf16 = jax.block_until_ready(dist_linear(x, weight))
    assert out_bf16.shape == (B, outdim)
    assert jnp.allclose(out_bf16, ref, atol=5e-2, rtol=5e-2), "bf16 path mismatch"

    print("KERNEL_OK")
</pallas_src>

<mosaic_0001>
module attributes {stable_mosaic.version = 11 : i64} {
  func.func @_distlinear_kernel(%arg0: i32, %arg1: i32, %arg2: memref<8x128xf32, #tpu.memory_space<vmem>>, %arg3: memref<128x128xf32, #tpu.memory_space<vmem>>, %arg4: memref<8x128xf32, #tpu.memory_space<vmem>>, %arg5: memref<8x128xf32, #tpu.memory_space<vmem>>) attributes {dimension_semantics = [#tpu.dimension_semantics<parallel>, #tpu.dimension_semantics<arbitrary>], iteration_bounds = array<i64: 1, 1>, scalar_prefetch = 0 : i64, scratch_operands = 1 : i64, tpu.core_type = #tpu.core_type<tc>, window_params = [{transform_indices = @transform_0, window_bounds = array<i64: 8, 128>}, {transform_indices = @transform_1, window_bounds = array<i64: 128, 128>}, {transform_indices = @transform_2, window_bounds = array<i64: 8, 128>}]} {
    %c0_i32 = arith.constant 0 : i32
    %0 = arith.cmpi eq, %arg1, %c0_i32 : i32
    %1 = arith.extui %0 : i1 to i32
    %c0_i32_0 = arith.constant 0 : i32
    %2 = arith.cmpi ne, %1, %c0_i32_0 : i32
    scf.if %2 {
      %c0_6 = arith.constant 0 : index
      %c0_7 = arith.constant 0 : index
      %7 = vector.load %arg2[%c0_6, %c0_7] : memref<8x128xf32, #tpu.memory_space<vmem>>, vector<8x128xf32>
      %8 = arith.mulf %7, %7 : vector<8x128xf32>
      %cst_8 = arith.constant dense<0.000000e+00> : vector<8xf32>
      %9 = vector.multi_reduction <add>, %8, %cst_8 [1] : vector<8x128xf32> to vector<8xf32>
      %10 = vector.shape_cast %9 : vector<8xf32> to vector<8x1xf32>
      %11 = math.sqrt %10 : vector<8x1xf32>
      %cst_9 = arith.constant 9.99999974E-6 : f32
      %12 = vector.broadcast %cst_9 : f32 to vector<8x1xf32>
      %13 = arith.addf %11, %12 : vector<8x1xf32>
      %14 = tpu.reciprocal %13 : vector<8x1xf32> -> vector<8x1xf32>
      %cst_10 = arith.constant 1.000000e+01 : f32
      %15 = vector.broadcast %cst_10 : f32 to vector<8x1xf32>
      %16 = arith.mulf %15, %14 : vector<8x1xf32>
      %17 = vector.broadcast %16 : vector<8x1xf32> to vector<8x128xf32>
      %18 = arith.mulf %7, %17 : vector<8x128xf32>
      %c0_11 = arith.constant 0 : index
      %c0_12 = arith.constant 0 : index
      %19 = vector.load %arg5[%c0_11, %c0_12] : memref<8x128xf32, #tpu.memory_space<vmem>>, vector<8x128xf32>
      tpu.vector_store %arg5[%c0_11, %c0_12], %18 {strides = array<i32>} : memref<8x128xf32, #tpu.memory_space<vmem>>, vector<8x128xf32>,
    } else {
    }
    %c0 = arith.constant 0 : index
    %c0_1 = arith.constant 0 : index
    %3 = vector.load %arg5[%c0, %c0_1] : memref<8x128xf32, #tpu.memory_space<vmem>>, vector<8x128xf32>
    %c0_2 = arith.constant 0 : index
    %c0_3 = arith.constant 0 : index
    %4 = vector.load %arg3[%c0_2, %c0_3] : memref<128x128xf32, #tpu.memory_space<vmem>>, vector<128x128xf32>
    %cst = arith.constant dense<0.000000e+00> : vector<8x128xf32>
    %5 = tpu.matmul %3, %4, %cst {dimension_numbers = #tpu.dot_dimension_numbers<[1], [1], [0], [0], [0, 0, 1, 0], [], []>} : vector<8x128xf32>, vector<128x128xf32>, vector<8x128xf32> -> vector<8x128xf32>
    %c0_4 = arith.constant 0 : index
    %c0_5 = arith.constant 0 : index
    %6 = vector.load %arg4[%c0_4, %c0_5] : memref<8x128xf32, #tpu.memory_space<vmem>>, vector<8x128xf32>
    tpu.vector_store %arg4[%c0_4, %c0_5], %5 {strides = array<i32>} : memref<8x128xf32, #tpu.memory_space<vmem>>, vector<8x128xf32>,
    return
  }
  func.func @transform_0(%arg0: i32, %arg1: i32) -> (i32, i32) {
    %c0_i32 = arith.constant 0 : i32
    %c0_i32_0 = arith.constant 0 : i32
    return %arg0, %c0_i32 : i32, i32
  }
  func.func @transform_1(%arg0: i32, %arg1: i32) -> (i32, i32) {
    %c0_i32 = arith.constant 0 : i32
    %c0_i32_0 = arith.constant 0 : i32
    return %arg1, %c0_i32 : i32, i32
  }
  func.func @transform_2(%arg0: i32, %arg1: i32) -> (i32, i32) {
    %c0_i32 = arith.constant 0 : i32
    return %arg0, %arg1 : i32, i32
  }
}

</mosaic_0001>

<llo_original>
// kernel: tpu_custom_call.1
$region0: #{tpu_custom_call.1}
  #allocation0 [shape = 'u32[]', space=smem, size = 0x4, offset = 0x4, fixed_abs, tag = 'smem constant byte address 0x4 - core index']
  #allocation1 [shape = 'u32[72,128]{1,0:T(1,128)}', space=vmem, size = 0x9000, scoped, tag = 'internal scratch']
  #allocation2 [shape = 'f32[8,128]{1,0:T(8,128)}', space=vmem, size = 0x1000, scoped, tag = 'scratch operand']
  %s0 = inlined_call_operand.hbm [shape: f32[8,128], index: 0, kind: input, shape index: {}]
  %s1 = inlined_call_operand.hbm [shape: f32[128,128], index: 1, kind: input, shape index: {}]
  %s2 = inlined_call_operand.hbm [shape: f32[8,128], index: 2, kind: output, shape index: {}]
  %s3 = sld [smem:[#allocation0]]
  $region30: #{tpu_custom_call.1} parent=0
    _
  %s5 = ssub.s32 1, %s3
  %s6 = scalar_select 0, %s5, %s3
  $region1: #{tpu_custom_call.1} parent=0
    #allocation3 [shape = 'u8[4096]{0}', space=vmem, size = 0x1000, scoped, tag = 'input window, operand 0, single buffered']
    #allocation4 [shape = 's32[1]{0}', space=sflag, size = 0x4, scoped, tag = 'scoped memory for tpu_custom_call.1']
    #allocation5 [shape = 's32[1]{0}', space=sflag, size = 0x4, scoped, tag = 'scoped memory for tpu_custom_call.1']
    #allocation6 [shape = 'u8[65536]{0}', space=vmem, size = 0x10000, scoped, tag = 'input window, operand 1, single buffered']
    #allocation7 [shape = 's32[1]{0}', space=sflag, size = 0x4, scoped, tag = 'scoped memory for tpu_custom_call.1']
    #allocation8 [shape = 'u8[4096]{0}', space=vmem, size = 0x1000, scoped, tag = 'output window, operand 0, single buffered']
    %7 = vsyncpa [#allocation4], 0
    %8 = vsyncpa [#allocation7], 0
    %9 = vsyncpa [#allocation5], 0
    // Predicated region
    $region2: #{tpu_custom_call.1} parent=1 // pred_check
      _
    $region3: #{tpu_custom_call.1} parent=1 // pred_check_branch
      %11 = sbr.rel (0) target = $region5
    $region4: #{tpu_custom_call.1} parent=1 // pred_region
      %13 = vsyncadd [#allocation4], 0
      %s15 = sshll.u32 %s0, 4
      %s16 = int_to_ptr.hbm [resolvable:$true] %s15
      %s17 = sshll.u32 [#allocation3], 4
      %s18 = int_to_ptr.vmem [resolvable:$true] %s17
      %20 = dma.hbm_to_vmem [thread:$0]  %s16, 128, %s18, [#allocation4]
    $region5: #{tpu_custom_call.1} parent=1 // pred_fallthru
      _
    // Predicated region
    $region6: #{tpu_custom_call.1} parent=1 // pred_check
      _
    $region7: #{tpu_custom_call.1} parent=1 // pred_check_branch
      %22 = sbr.rel (0) target = $region9
    $region8: #{tpu_custom_call.1} parent=1 // pred_region
      %24 = vsyncadd [#allocation7], 0
      %s25 = sshll.u32 %s1, 4
      %s26 = int_to_ptr.hbm [resolvable:$true] %s25
      %s27 = sshll.u32 [#allocation6], 4
      %s28 = int_to_ptr.vmem [resolvable:$true] %s27
      %33 = dma.hbm_to_vmem [thread:$0]  %s26, 2048, %s28, [#allocation7], 128, 128, 8
    $region9: #{tpu_custom_call.1} parent=1 // pred_fallthru
      _
    // Predicated region
    $region10: #{tpu_custom_call.1} parent=1 // pred_check
      _
    $region11: #{tpu_custom_call.1} parent=1 // pred_check_branch
      %35 = sbr.rel (0) target = $region13
    $region12: #{tpu_custom_call.1} parent=1 // pred_region
      %37 = dma.done [#allocation4], 128
    $region13: #{tpu_custom_call.1} parent=1 // pred_fallthru
      _
    // Predicated region
    $region14: #{tpu_custom_call.1} parent=1 // pred_check
      _
    $region15: #{tpu_custom_call.1} parent=1 // pred_check_branch
      %39 = sbr.rel (0) target = $region17
    $region16: #{tpu_custom_call.1} parent=1 // pred_region
      %41 = dma.done [#allocation7], 2048
    $region17: #{tpu_custom_call.1} parent=1 // pred_fallthru
      _
    %p42 = scmp.eq.s32.totalorder 0, 0
    // Predicated region
    $region18: #{tpu_custom_call.1} parent=1 // pred_check
      %p43 = pneg %p42
    $region19: #{tpu_custom_call.1} parent=1 // pred_check_branch
      %45 = sbr.rel (%p43) target = $region21
    $region20: #{tpu_custom_call.1} parent=1 // pred_region
      %v46 = vld [vmem:[#allocation3] sm:$0xff]
      %v47 = vmul.f32 %v46, %v46
      %48 = vadd.xlane.f32.xlu0 %v47
      %v49 = vpop.xlane.xlu0 %48
      %v50 = vrsqrt.pop %v49
      %v51 = vmul.f32 %v50, %v49
      %v52 = vmul.f32 %v51, %v50
      %v53 = vmul.f32 0.5, %v52
      %v54 = vsub.f32 1.5, %v53
      %v55 = vmul.f32 %v50, %v54
      %v56 = vmul.f32 %v49, %v55
      %vm57 = vcmp.eq.f32.partialorder %v49, inf
      %v58 = vsel %vm57, %v49, %v56
      %vm59 = vcmp.eq.f32.partialorder %v49, 0.0
      %v60 = vand.u32 %v49, 2147483648
      %v61 = vsel %vm59, %v60, %v58
      %v62 = vadd.f32 %v61, 1e-05
      %v63 = vrcp.pop %v62
      %v64 = vmul.f32 %v62, %v63
      %v65 = vsub.f32 1.0, %v64
      %v66 = vmul.f32 %v63, %v65
      %v67 = vadd.f32 %v63, %v66
      %vm68 = vweird.f32 %v62
      %vm69 = vweird.f32 %v63
      %vm70 = vmor %vm68, %vm69
      %v71 = vsel %vm70, %v63, %v67
      %v72 = vand.u32 2147483647, %v62
      %vm73 = vcmp.eq.f32.partialorder %v72, 8.507059e+37
      %v74 = vand.u32 %v62, 2147483648
      %v75 = vor.u32 1.1754944e-38, %v74
      %v76 = vsel %vm73, %v75, %v71
      %v77 = vmul.f32 %v76, 10.0
      %v78 = vmul.f32 %v46, %v77
      %79 = vst [vmem:[#allocation2] sm:$0xff] %v78
    $region21: #{tpu_custom_call.1} parent=1 // pred_fallthru
      _
    %v80 = vld [vmem:[#allocation2] sm:$0xff]
    %v81 = vld [vmem:[#allocation6] sm:$0xff]
    %v82 = vld [vmem:[#allocation6 + $0x8] sm:$0xff]
    %v83 = vld [vmem:[#allocation6 + $0x10] sm:$0xff]
    %v84 = vld [vmem:[#allocation6 + $0x18] sm:$0xff]
    %v85 = vld [vmem:[#allocation6 + $0x20] sm:$0xff]
    %v86 = vld [vmem:[#allocation6 + $0x28] sm:$0xff]
    %v87 = vld [vmem:[#allocation6 + $0x30] sm:$0xff]
    %v88 = vld [vmem:[#allocation6 + $0x38] sm:$0xff]
    %v89 = vld [vmem:[#allocation6 + $0x40] sm:$0xff]
    %v90 = vld [vmem:[#allocation6 + $0x48] sm:$0xff]
    %v91 = vld [vmem:[#allocation6 + $0x50] sm:$0xff]
    %v92 = vld [vmem:[#allocation6 + $0x58] sm:$0xff]
    %v93 = vld [vmem:[#allocation6 + $0x60] sm:$0xff]
    %v94 = vld [vmem:[#allocation6 + $0x68] sm:$0xff]
    %v95 = vld [vmem:[#allocation6 + $0x70] sm:$0xff]
    %v96 = vld [vmem:[#allocation6 + $0x78] sm:$0xff]
    %97 = vmatpush.xpose.msra.mxu0 %v96
    %98 = vmatpush.xpose.msra.mxu0 %v95
    %99 = vmatpush.xpose.msra.mxu0 %v94
    %100 = vmatpush.xpose.msra.mxu0 %v93
    %101 = vmatpush.xpose.msra.mxu0 %v92
    %102 = vmatpush.xpose.msra.mxu0 %v91
    %103 = vmatpush.xpose.msra.mxu0 %v90
    %104 = vmatpush.xpose.msra.mxu0 %v89
    %105 = vmatpush.xpose.msra.mxu0 %v88
    %106 = vmatpush.xpose.msra.mxu0 %v87
    %107 = vmatpush.xpose.msra.mxu0 %v86
    %108 = vmatpush.xpose.msra.mxu0 %v85
    %109 = vmatpush.xpose.msra.mxu0 %v84
    %110 = vmatpush.xpose.msra.mxu0 %v83
    %111 = vmatpush.xpose.msra.mxu0 %v82
    %112 = vmatpush.xpose.msra.mxu0 %v81
    %113 = vmatmul.f32.gmra.mxu0 %v80
    %v114 = vpop.f32.mrf.mxu0
    %v115 = vadd.f32 0.0, %v114
    %116 = vdwg.mxu0
    %117 = vst [vmem:[#allocation8] sm:$0xff] %v115
    // Predicated region
    $region22: #{tpu_custom_call.1} parent=1 // pred_check
      _
    $region23: #{tpu_custom_call.1} parent=1 // pred_check_branch
      %119 = sbr.rel (0) target = $region25
    $region24: #{tpu_custom_call.1} parent=1 // pred_region
      %121 = vsyncadd [#allocation5], 0
      %s123 = sshll.u32 [#allocation8], 4
      %s124 = int_to_ptr.vmem [resolvable:$true] %s123
      %s125 = sshll.u32 %s2, 4
      %s126 = int_to_ptr.hbm [resolvable:$true] %s125
      %128 = dma.vmem_to_hbm [thread:$0]  %s124, 128, %s126, [#allocation5]
    $region25: #{tpu_custom_call.1} parent=1 // pred_fallthru
      _
    // Predicated region
    $region26: #{tpu_custom_call.1} parent=1 // pred_check
      _
    $region27: #{tpu_custom_call.1} parent=1 // pred_check_branch
      %130 = sbr.rel (0) target = $region29
    $region28: #{tpu_custom_call.1} parent=1 // pred_region
      %132 = dma.done [#allocation5], 128
    $region29: #{tpu_custom_call.1} parent=1 // pred_fallthru
      _
    %133 = vsyncpa [#allocation4], 1
    %134 = vsyncpa [#allocation7], 1
    %135 = vsyncpa [#allocation5], 1

</llo_original>
